<compile_context>
chip_gen: v5e
topology: v5e:2x2
jax: 0.10.0
libtpu: 0.0.40
codegen_flags: <defaults>
</compile_context>

<pallas_src>
import functools

import jax
import jax.numpy as jnp
from jax import lax
from jax.experimental import pallas as pl
from jax.experimental.pallas import tpu as pltpu

LANE = 128
SUBLANE = 8
_ALIGN = SUBLANE * LANE                  # 1024 elements
_VMEM_BUDGET = 48 * 1024 * 1024          # scoped-VMEM ceiling we request (< 64 MiB phys on v7x)
_TARGET_DMA_BYTES = 4 << 20              # per input per grid step


def _mse_partial_kernel(x_ref, y_ref, o_ref, *, block_rows, tiles_per_core,
                        valid_rows, need_mask):
    """Accumulate per-(sublane, lane) partial sums of (x - y)^2 into o_ref.

    o_ref is an (8, 128) f32 block resident across the reduction axis (grid
    axis 1); each core group (grid axis 0) owns its own block.
    """
    c = pl.program_id(0)
    t = pl.program_id(1)

    @pl.when(t == 0)
    def _():
        o_ref[...] = jnp.zeros_like(o_ref)

    d = x_ref[...].astype(jnp.float32) - y_ref[...].astype(jnp.float32)
    dd = d * d

    def _accum(v):
        # Fold sublane groups onto a single (8, 128) vreg: pure VPU adds.
        o_ref[...] += jnp.sum(v.reshape(block_rows // SUBLANE, SUBLANE, LANE), axis=0)

    if need_mask:
        # Scalar row budget for this tile, computed once per step.
        row0 = (c * tiles_per_core + t) * block_rows
        remaining = valid_rows - row0

        @pl.when(remaining >= block_rows)
        def _():
            # Steady state: no mask work at all.
            _accum(dd)

        @pl.when(remaining < block_rows)
        def _():
            # Ragged edge tile or clamped duplicate tile only.
            local = lax.broadcasted_iota(jnp.int32, (block_rows, LANE), 0)
            _accum(jnp.where(local < remaining, dd, 0.0))
    else:
        _accum(dd)


def _xla_sq_diff_sum(xf, yf):
    d = xf.astype(jnp.float32) - yf.astype(jnp.float32)
    return jnp.sum(d * d)


def _num_tensorcores():
    """2 on v7-class chips (two TensorCores per chip), else 1 (v5e/v6e)."""
    try:
        kind = jax.devices()[0].device_kind.lower()
    except Exception:  # detection failure -> safe single-core path
        return 1
    return 2 if "v7" in kind else 1


def _pick_block_rows(rows, itemsize):
    """Tile rows sized in bytes (~4 MiB DMA per input per step), shrunk only
    if the estimated VMEM footprint (buffers + f32 temporaries) would exceed
    the scoped budget."""
    target = _TARGET_DMA_BYTES
    temps = 5 if itemsize < 4 else 3     # f32 temporaries per element (casts, d, dd, mask)
    while True:
        br = max(SUBLANE, (target // (LANE * itemsize)) // SUBLANE * SUBLANE)
        need = 4 * br * LANE * itemsize + temps * br * LANE * 4
        if need <= _VMEM_BUDGET or target <= (1 << 20):
            break
        target //= 2
    return min(br, rows)


def similarity_loss(x, y, *, block_rows=None, min_kernel_elems=1 << 19):
    """MSE(x, y) with 'mean' reduction (== nn.MSELoss()(x, y))."""
    assert x.shape == y.shape, "input/target must have identical shapes"
    n = x.size
    assert n > 0

    xf = x.reshape(-1)
    yf = y.reshape(-1)

    # Small-input fast path: a kernel launch is pure overhead here.
    if n < min_kernel_elems:
        return _xla_sq_diff_sum(xf, yf) / jnp.float32(n)

    n_aligned = (n // _ALIGN) * _ALIGN
    tail = n - n_aligned

    total = jnp.zeros((), jnp.float32)

    if n_aligned:
        rows = n_aligned // LANE                       # multiple of 8
        if tail:
            x2 = xf[:n_aligned].reshape(rows, LANE)
            y2 = yf[:n_aligned].reshape(rows, LANE)
        else:                                          # zero-copy reshape
            x2 = xf.reshape(rows, LANE)
            y2 = yf.reshape(rows, LANE)

        itemsize = x.dtype.itemsize
        if block_rows is None:
            br = _pick_block_rows(rows, itemsize)
        else:
            br = min(rows, max(SUBLANE, (block_rows // SUBLANE) * SUBLANE))

        tiles_total = (rows + br - 1) // br

        # 2-way core split only where it buys real parallelism (v7-class, >= 4 tiles).
        ncores = 2 if (_num_tensorcores() >= 2 and tiles_total >= 4) else 1
        tiles_per_core = (tiles_total + ncores - 1) // ncores
        need_clamp = ncores * tiles_per_core != tiles_total
        need_mask = (ncores * tiles_per_core * br) != rows

        if need_clamp:
            def in_index_map(c, t):
                return (jnp.minimum(c * tiles_per_core + t, tiles_total - 1), 0)
        else:
            def in_index_map(c, t):
                return (c * tiles_per_core + t, 0)

        if ncores == 2:
            semantics = (pltpu.CORE_PARALLEL, pltpu.ARBITRARY)
        else:
            semantics = ("arbitrary", "arbitrary")

        kernel = functools.partial(
            _mse_partial_kernel,
            block_rows=br,
            tiles_per_core=tiles_per_core,
            valid_rows=rows,
            need_mask=need_mask,
        )

        partials = pl.pallas_call(
            kernel,
            out_shape=jax.ShapeDtypeStruct((ncores, SUBLANE, LANE), jnp.float32),
            grid_spec=pltpu.PrefetchScalarGridSpec(
                num_scalar_prefetch=0,
                grid=(ncores, tiles_per_core),
                in_specs=[
                    pl.BlockSpec((br, LANE), in_index_map),
                    pl.BlockSpec((br, LANE), in_index_map),
                ],
                out_specs=pl.BlockSpec((None, SUBLANE, LANE), lambda c, t: (c, 0, 0)),
            ),
            compiler_params=pltpu.CompilerParams(
                dimension_semantics=semantics,
                vmem_limit_bytes=_VMEM_BUDGET,
            ),
            cost_estimate=pl.CostEstimate(
                flops=3 * n_aligned,
                transcendentals=0,
                bytes_accessed=n_aligned * (x.dtype.itemsize + y.dtype.itemsize)
                + ncores * SUBLANE * LANE * 4,
            ),
        )(x2, y2)

        total = total + jnp.sum(partials)

    if tail:
        # <1024 leftover elements: tiny XLA reduction instead of padded copies.
        total = total + _xla_sq_diff_sum(xf[n_aligned:], yf[n_aligned:])

    return total / jnp.float32(n)


def _check(x, t, rtol=5e-5, atol=1e-6, **kw):
    loss = jax.block_until_ready(similarity_loss(x, t, **kw))
    ref = jnp.mean(jnp.square(x.astype(jnp.float32) - t.astype(jnp.float32)))
    assert jnp.allclose(loss, ref, rtol=rtol, atol=atol), (x.shape, x.dtype, loss, ref)
    return loss


if __name__ == "__main__":
    key = jax.random.PRNGKey(0)
    ks = jax.random.split(key, 10)

    # Primary case: small NCHW tensors consistent with the module's forward.
    # Goes through the XLA fast path (kernel launch overhead not worth it).
    x = jax.random.normal(ks[0], (2, 4, 16, 16), dtype=jnp.float32)
    t = jax.random.normal(ks[1], (2, 4, 16, 16), dtype=jnp.float32)
    _check(x, t)
    # Same shape with the Pallas kernel forced, to validate the kernel itself.
    _check(x, t, min_kernel_elems=0)

    # Unaligned numel -> aligned-prefix kernel + tiny XLA tail (no jnp.pad copies).
    xu = jax.random.normal(ks[2], (2, 4, 16, 17), dtype=jnp.float32)
    tu = jax.random.normal(ks[3], (2, 4, 16, 17), dtype=jnp.float32)
    _check(xu, tu, min_kernel_elems=0)

    # Tiny unaligned tensor -> pure XLA fast path.
    _check(jax.random.normal(ks[4], (2, 3, 7, 5), dtype=jnp.float32),
           jax.random.normal(ks[5], (2, 3, 7, 5), dtype=jnp.float32))

    # Multi-tile f32 with a ragged edge tile -> exercises the pl.when-gated mask.
    xl = jax.random.normal(ks[6], (2, 8, 256, 513), dtype=jnp.float32)
    tl = jax.random.normal(ks[7], (2, 8, 256, 513), dtype=jnp.float32)
    _check(xl, tl)

    # bf16 inputs streamed in bf16 and cast to f32 inside the kernel.
    xb = jax.random.normal(ks[8], (4, 16, 128, 96), dtype=jnp.float32).astype(jnp.bfloat16)
    tb = jax.random.normal(ks[9], (4, 16, 128, 96), dtype=jnp.float32).astype(jnp.bfloat16)
    _check(xb, tb)

    print("KERNEL_OK")
</pallas_src>

<mosaic_0001>
module attributes {stable_mosaic.version = 11 : i64} {
  func.func @_mse_partial_kernel(%arg0: i32, %arg1: i32, %arg2: memref<16x128xf32, #tpu.memory_space<vmem>>, %arg3: memref<16x128xf32, #tpu.memory_space<vmem>>, %arg4: memref<1x8x128xf32, #tpu.memory_space<vmem>>) attributes {dimension_semantics = [#tpu.dimension_semantics<arbitrary>, #tpu.dimension_semantics<arbitrary>], iteration_bounds = array<i64: 1, 1>, scalar_prefetch = 0 : i64, scratch_operands = 0 : i64, tpu.core_type = #tpu.core_type<tc>, window_params = [{transform_indices = @transform_0, window_bounds = array<i64: 16, 128>}, {transform_indices = @transform_1, window_bounds = array<i64: 16, 128>}, {transform_indices = @transform_2, window_bounds = array<i64: 1, 8, 128>}]} {
    %c0_i32 = arith.constant 0 : i32
    %0 = arith.cmpi eq, %arg1, %c0_i32 : i32
    %1 = arith.extui %0 : i1 to i32
    %c0_i32_0 = arith.constant 0 : i32
    %2 = arith.cmpi ne, %1, %c0_i32_0 : i32
    scf.if %2 {
      %cst_10 = arith.constant 0.000000e+00 : f32
      %15 = vector.broadcast %cst_10 : f32 to vector<8x128xf32>
      %c0_11 = arith.constant 0 : index
      %c0_12 = arith.constant 0 : index
      %c0_13 = arith.constant 0 : index
      %16 = vector.load %arg4[%c0_11, %c0_12, %c0_13] : memref<1x8x128xf32, #tpu.memory_space<vmem>>, vector<1x8x128xf32>
      %17 = vector.shape_cast %16 : vector<1x8x128xf32> to vector<8x128xf32>
      %18 = vector.shape_cast %15 : vector<8x128xf32> to vector<1x8x128xf32>
      tpu.vector_store %arg4[%c0_11, %c0_12, %c0_13], %18 {strides = array<i32>} : memref<1x8x128xf32, #tpu.memory_space<vmem>>, vector<1x8x128xf32>,
    } else {
    }
    %c0 = arith.constant 0 : index
    %c0_1 = arith.constant 0 : index
    %3 = vector.load %arg2[%c0, %c0_1] : memref<16x128xf32, #tpu.memory_space<vmem>>, vector<16x128xf32>
    %c0_2 = arith.constant 0 : index
    %c0_3 = arith.constant 0 : index
    %4 = vector.load %arg3[%c0_2, %c0_3] : memref<16x128xf32, #tpu.memory_space<vmem>>, vector<16x128xf32>
    %5 = arith.subf %3, %4 : vector<16x128xf32>
    %6 = arith.mulf %5, %5 : vector<16x128xf32>
    %c0_4 = arith.constant 0 : index
    %c0_5 = arith.constant 0 : index
    %c0_6 = arith.constant 0 : index
    %7 = vector.load %arg4[%c0_4, %c0_5, %c0_6] : memref<1x8x128xf32, #tpu.memory_space<vmem>>, vector<1x8x128xf32>
    %8 = vector.shape_cast %7 : vector<1x8x128xf32> to vector<8x128xf32>
    %9 = vector.shape_cast %6 : vector<16x128xf32> to vector<2x8x128xf32>
    %cst = arith.constant dense<0.000000e+00> : vector<8x128xf32>
    %10 = vector.multi_reduction <add>, %9, %cst [0] : vector<2x8x128xf32> to vector<8x128xf32>
    %11 = arith.addf %8, %10 : vector<8x128xf32>
    %c0_7 = arith.constant 0 : index
    %c0_8 = arith.constant 0 : index
    %c0_9 = arith.constant 0 : index
    %12 = vector.load %arg4[%c0_7, %c0_8, %c0_9] : memref<1x8x128xf32, #tpu.memory_space<vmem>>, vector<1x8x128xf32>
    %13 = vector.shape_cast %12 : vector<1x8x128xf32> to vector<8x128xf32>
    %14 = vector.shape_cast %11 : vector<8x128xf32> to vector<1x8x128xf32>
    tpu.vector_store %arg4[%c0_7, %c0_8, %c0_9], %14 {strides = array<i32>} : memref<1x8x128xf32, #tpu.memory_space<vmem>>, vector<1x8x128xf32>,
    return
  }
  func.func @transform_0(%arg0: i32, %arg1: i32) -> (i32, i32) {
    %c1_i32 = arith.constant 1 : i32
    %0 = arith.muli %arg0, %c1_i32 : i32
    %1 = arith.addi %0, %arg1 : i32
    %c0_i32 = arith.constant 0 : i32
    %c0_i32_0 = arith.constant 0 : i32
    return %1, %c0_i32 : i32, i32
  }
  func.func @transform_1(%arg0: i32, %arg1: i32) -> (i32, i32) {
    %c1_i32 = arith.constant 1 : i32
    %0 = arith.muli %arg0, %c1_i32 : i32
    %1 = arith.addi %0, %arg1 : i32
    %c0_i32 = arith.constant 0 : i32
    %c0_i32_0 = arith.constant 0 : i32
    return %1, %c0_i32 : i32, i32
  }
  func.func @transform_2(%arg0: i32, %arg1: i32) -> (i32, i32, i32) {
    %c0_i32 = arith.constant 0 : i32
    %c0_i32_0 = arith.constant 0 : i32
    %c0_i32_1 = arith.constant 0 : i32
    return %arg0, %c0_i32, %c0_i32_0 : i32, i32, i32
  }
}

</mosaic_0001>

<llo_original>
// kernel: tpu_custom_call.1
$region0: #{tpu_custom_call.1}
  #allocation0 [shape = 'u32[]', space=smem, size = 0x4, offset = 0x4, fixed_abs, tag = 'smem constant byte address 0x4 - core index']
  #allocation1 [shape = 'u32[72,128]{1,0:T(1,128)}', space=vmem, size = 0x9000, scoped, tag = 'internal scratch']
  %s0 = inlined_call_operand.hbm [shape: f32[16,128], index: 0, kind: input, shape index: {}]
  %s1 = inlined_call_operand.hbm [shape: f32[16,128], index: 1, kind: input, shape index: {}]
  %s2 = inlined_call_operand.hbm [shape: f32[1,8,128], index: 2, kind: output, shape index: {}]
  %s3 = sld [smem:[#allocation0]]
  $region30: #{tpu_custom_call.1} parent=0
    _
  %s5 = ssub.s32 1, %s3
  %s6 = scalar_select 0, %s5, %s3
  $region1: #{tpu_custom_call.1} parent=0
    #allocation2 [shape = 'u8[8192]{0}', space=vmem, size = 0x2000, scoped, tag = 'input window, operand 0, single buffered']
    #allocation3 [shape = 's32[1]{0}', space=sflag, size = 0x4, scoped, tag = 'scoped memory for tpu_custom_call.1']
    #allocation4 [shape = 's32[1]{0}', space=sflag, size = 0x4, scoped, tag = 'scoped memory for tpu_custom_call.1']
    #allocation5 [shape = 'u8[8192]{0}', space=vmem, size = 0x2000, scoped, tag = 'input window, operand 1, single buffered']
    #allocation6 [shape = 's32[1]{0}', space=sflag, size = 0x4, scoped, tag = 'scoped memory for tpu_custom_call.1']
    #allocation7 [shape = 'u8[4096]{0}', space=vmem, size = 0x1000, scoped, tag = 'output window, operand 0, single buffered']
    %7 = vsyncpa [#allocation3], 0
    %8 = vsyncpa [#allocation6], 0
    %9 = vsyncpa [#allocation4], 0
    // Predicated region
    $region2: #{tpu_custom_call.1} parent=1 // pred_check
      _
    $region3: #{tpu_custom_call.1} parent=1 // pred_check_branch
      %11 = sbr.rel (0) target = $region5
    $region4: #{tpu_custom_call.1} parent=1 // pred_region
      %s12 = sadd.s32 0, 0
      %s13 = smul.u32 2, %s12
      %15 = vsyncadd [#allocation3], 0
      %s16 = smul.addr %s13, 8
      %s17 = scalar_lea.hbm %s0, %s16
      %s18 = sshll.u32 %s17, 4
      %s19 = int_to_ptr.hbm [resolvable:$true] %s18
      %s20 = sshll.u32 [#allocation2], 4
      %s21 = int_to_ptr.vmem [resolvable:$true] %s20
      %26 = dma.hbm_to_vmem [thread:$0]  %s19, 256, %s21, [#allocation3], 128, 128, 8
    $region5: #{tpu_custom_call.1} parent=1 // pred_fallthru
      _
    // Predicated region
    $region6: #{tpu_custom_call.1} parent=1 // pred_check
      _
    $region7: #{tpu_custom_call.1} parent=1 // pred_check_branch
      %28 = sbr.rel (0) target = $region9
    $region8: #{tpu_custom_call.1} parent=1 // pred_region
      %s29 = sadd.s32 0, 0
      %s30 = smul.u32 2, %s29
      %32 = vsyncadd [#allocation6], 0
      %s33 = smul.addr %s30, 8
      %s34 = scalar_lea.hbm %s1, %s33
      %s35 = sshll.u32 %s34, 4
      %s36 = int_to_ptr.hbm [resolvable:$true] %s35
      %s37 = sshll.u32 [#allocation5], 4
      %s38 = int_to_ptr.vmem [resolvable:$true] %s37
      %43 = dma.hbm_to_vmem [thread:$0]  %s36, 256, %s38, [#allocation6], 128, 128, 8
    $region9: #{tpu_custom_call.1} parent=1 // pred_fallthru
      _
    // Predicated region
    $region10: #{tpu_custom_call.1} parent=1 // pred_check
      _
    $region11: #{tpu_custom_call.1} parent=1 // pred_check_branch
      %45 = sbr.rel (0) target = $region13
    $region12: #{tpu_custom_call.1} parent=1 // pred_region
      %47 = dma.done [#allocation3], 256
    $region13: #{tpu_custom_call.1} parent=1 // pred_fallthru
      _
    // Predicated region
    $region14: #{tpu_custom_call.1} parent=1 // pred_check
      _
    $region15: #{tpu_custom_call.1} parent=1 // pred_check_branch
      %49 = sbr.rel (0) target = $region17
    $region16: #{tpu_custom_call.1} parent=1 // pred_region
      %51 = dma.done [#allocation6], 256
    $region17: #{tpu_custom_call.1} parent=1 // pred_fallthru
      _
    %s52 = sadd.s32 0, 0
    %s53 = smul.u32 2, %s52
    %s54 = sadd.s32 0, 0
    %s55 = smul.u32 2, %s54
    %p56 = scmp.eq.s32.totalorder 0, 0
    // Predicated region
    $region18: #{tpu_custom_call.1} parent=1 // pred_check
      %p57 = pneg %p56
    $region19: #{tpu_custom_call.1} parent=1 // pred_check_branch
      %59 = sbr.rel (%p57) target = $region21
    $region20: #{tpu_custom_call.1} parent=1 // pred_region
      %60 = vst [vmem:[#allocation7] sm:$0xff] 0.0
    $region21: #{tpu_custom_call.1} parent=1 // pred_fallthru
      _
    %v61 = vld [vmem:[#allocation2] sm:$0xff]
    %v62 = vld [vmem:[#allocation2 + $0x8] sm:$0xff]
    %v63 = vld [vmem:[#allocation5] sm:$0xff]
    %v64 = vld [vmem:[#allocation5 + $0x8] sm:$0xff]
    %v65 = vsub.f32 %v61, %v63
    %v66 = vsub.f32 %v62, %v64
    %v67 = vmul.f32 %v65, %v65
    %v68 = vmul.f32 %v66, %v66
    %v69 = vld [vmem:[#allocation7] sm:$0xff]
    %v70 = vadd.f32 %v67, %v68
    %v71 = vadd.f32 %v69, %v70
    %72 = vst [vmem:[#allocation7] sm:$0xff] %v71
    // Predicated region
    $region22: #{tpu_custom_call.1} parent=1 // pred_check
      _
    $region23: #{tpu_custom_call.1} parent=1 // pred_check_branch
      %74 = sbr.rel (0) target = $region25
    $region24: #{tpu_custom_call.1} parent=1 // pred_region
      %76 = vsyncadd [#allocation4], 0
      %s78 = sshll.u32 [#allocation7], 4
      %s79 = int_to_ptr.vmem [resolvable:$true] %s78
      %s80 = sshll.u32 %s2, 4
      %s81 = int_to_ptr.hbm [resolvable:$true] %s80
      %83 = dma.vmem_to_hbm [thread:$0]  %s79, 128, %s81, [#allocation4]
    $region25: #{tpu_custom_call.1} parent=1 // pred_fallthru
      _
    // Predicated region
    $region26: #{tpu_custom_call.1} parent=1 // pred_check
      _
    $region27: #{tpu_custom_call.1} parent=1 // pred_check_branch
      %85 = sbr.rel (0) target = $region29
    $region28: #{tpu_custom_call.1} parent=1 // pred_region
      %87 = dma.done [#allocation4], 128
    $region29: #{tpu_custom_call.1} parent=1 // pred_fallthru
      _
    %88 = vsyncpa [#allocation3], 1
    %89 = vsyncpa [#allocation6], 1
    %90 = vsyncpa [#allocation4], 1

</llo_original>
